<compile_context>
chip_gen: v6e
topology: v6e:2x2x1
jax: 0.10.0
libtpu: 0.0.40
codegen_flags: <defaults>
</compile_context>

<pallas_src>
import functools

import jax
import jax.numpy as jnp
from jax.experimental import pallas as pl
from jax.experimental.pallas import tpu as pltpu

DOMAINS = ("music", "speech", "ambient", "noise", "other")   # len(DOMAINS) = 5
KSIZE = 3


# ---------------------------------------------------------------------------
# Pallas kernel: one (batch b, T-tile t) step of the whole forward pass.
# ---------------------------------------------------------------------------
def _domain_classifier_kernel(x_ref,
                              w1_ref, b1_ref, w2_ref, b2_ref, w3_ref, b3_ref,
                              out_ref,
                              c1_ref, c2_ref, c3_ref,
                              *, inv_t, mm_dtype):
    t = pl.program_id(1)

    # First T tile of each batch element: zero the causal-pad halos and the
    # average-pool accumulator (output block is resident across the T axis).
    @pl.when(t == 0)
    def _():
        c1_ref[...] = jnp.zeros_like(c1_ref)
        c2_ref[...] = jnp.zeros_like(c2_ref)
        c3_ref[...] = jnp.zeros_like(c3_ref)
        out_ref[...] = jnp.zeros_like(out_ref)

    def elu(v, alpha):
        # F.elu(x, alpha) = x if x > 0 else alpha * (exp(x) - 1)    (f32 math)
        return jnp.where(v > 0, v, alpha * (jnp.exp(jnp.minimum(v, 0.0)) - 1.0))

    def causal_conv(h, c_ref, w_ref, b_ref):
        # h:     (TILE_T, Cin) f32  -- this layer's input for the current tile
        # c_ref: (K-1, Cin)    f32  -- last K-1 input rows of the previous tile
        # w_ref: (K*Cin, Cout)      -- taps folded into the contraction dim
        # b_ref: (1, Cout)     f32
        tile_t = h.shape[0]
        hist = c_ref[...]                               # load old halo
        c_ref[...] = h[tile_t - (KSIZE - 1):, :]        # save halo for next tile
        padded = jnp.concatenate([hist, h], axis=0)     # (TILE_T + K - 1, Cin)
        # Fused taps: tap k reads rows [k : k + TILE_T] of `padded` (causal
        # shift via static sublane slices, not MXU shift matmuls).
        hs = jnp.concatenate(
            [padded[k:k + tile_t, :] for k in range(KSIZE)], axis=-1)
        acc = jnp.dot(hs.astype(mm_dtype), w_ref[...],
                      preferred_element_type=jnp.float32)
        return acc + b_ref[...]                         # bias + ELU stay in f32

    h = x_ref[...].astype(jnp.float32)                  # (TILE_T, classes)
    h = elu(causal_conv(h, c1_ref, w1_ref, b1_ref), 0.9)
    h = elu(causal_conv(h, c2_ref, w2_ref, b2_ref), 0.8)
    h = elu(causal_conv(h, c3_ref, w3_ref, b3_ref), 0.7)

    # Global average pool: accumulate the per-tile sum; fold 1/T in at the end.
    out_ref[...] = out_ref[...] + jnp.sum(h, axis=0, keepdims=True)

    @pl.when(t == pl.num_programs(1) - 1)
    def _():
        out_ref[...] = out_ref[...] * inv_t


# ---------------------------------------------------------------------------
# Wrapper: parameter plumbing, tiling choice and pallas_call.
# ---------------------------------------------------------------------------
def _pick_tile_t(T, max_tile=512):
    if T <= max_tile:
        return T
    for cand in range(max_tile, 7, -8):
        if cand % 8 == 0 and T % cand == 0:
            return cand
    return T        # no aligned divisor; fall back to a single full-T tile


def domain_classifier(x_ncw, params, *, matmul_dtype=jnp.bfloat16, max_tile_t=512):
    """x_ncw: (B, classes, T) float32 (PyTorch NCW). Returns (B, len(DOMAINS))."""
    w1, b1, w2, b2, w3, b3 = params                 # w: (K, Cin, Cout), b: (1, Cout)
    B, c_in, T = x_ncw.shape
    K = w1.shape[0]
    n_dom = w3.shape[-1]
    assert T >= K, "sequence must be at least the kernel size"

    # NCW -> (B, T, C): channels on the lane axis.
    # NOTE: this is one extra HBM pass; skip it if the producer can emit (B,T,C).
    x_btc = jnp.transpose(x_ncw, (0, 2, 1)).astype(jnp.float32)

    # Fold the K taps into the contraction dim and cast MXU operands (bf16 by
    # default; accumulation stays f32 inside the kernel).
    def prep_w(w):
        k, cin, cout = w.shape
        return w.reshape(k * cin, cout).astype(matmul_dtype)

    w1c, w2c, w3c = prep_w(w1), prep_w(w2), prep_w(w3)
    b1f, b2f, b3f = (b.astype(jnp.float32) for b in (b1, b2, b3))

    tile_t = _pick_tile_t(T, max_tile_t)
    grid = (B, T // tile_t)

    def full_spec(arr):
        nd = arr.ndim
        return pl.BlockSpec(arr.shape, lambda b, t: (0,) * nd)

    kernel = functools.partial(_domain_classifier_kernel,
                               inv_t=float(1.0 / T), mm_dtype=matmul_dtype)

    out = pl.pallas_call(
        kernel,
        out_shape=jax.ShapeDtypeStruct((B, 1, n_dom), jnp.float32),
        grid=grid,
        in_specs=[
            pl.BlockSpec((None, tile_t, c_in), lambda b, t: (b, t, 0)),
            full_spec(w1c), full_spec(b1f),
            full_spec(w2c), full_spec(b2f),
            full_spec(w3c), full_spec(b3f),
        ],
        out_specs=pl.BlockSpec((None, 1, n_dom), lambda b, t: (b, 0, 0)),
        scratch_shapes=[
            pltpu.VMEM((K - 1, w1.shape[1]), jnp.float32),   # layer-1 input halo
            pltpu.VMEM((K - 1, w2.shape[1]), jnp.float32),   # layer-2 input halo
            pltpu.VMEM((K - 1, w3.shape[1]), jnp.float32),   # layer-3 input halo
        ],
        compiler_params=pltpu.CompilerParams(
            dimension_semantics=("parallel", "arbitrary"),
            vmem_limit_bytes=32 * 1024 * 1024,
        ),
    )(x_btc, w1c, b1f, w2c, b2f, w3c, b3f)

    return out.reshape(B, n_dom)


# ---------------------------------------------------------------------------
# Deterministic parameter init (matches the PyTorch module's shapes).
# ---------------------------------------------------------------------------
def init_params(key, classes, n_domains, kernel_size=KSIZE):
    c1, c2 = classes * 4, classes * 8
    dims = [(classes, c1), (c1, c2), (c2, n_domains)]
    params = []
    for i, (cin, cout) in enumerate(dims):
        kw, kb = jax.random.split(jax.random.fold_in(key, i))
        bound = 1.0 / jnp.sqrt(cin * kernel_size)
        # PyTorch conv weight is (Cout, Cin, K); kernel wants (K, Cin, Cout).
        w = jax.random.uniform(kw, (kernel_size, cin, cout), jnp.float32,
                               -bound, bound)
        b = jax.random.uniform(kb, (1, cout), jnp.float32, -bound, bound)
        params += [w, b]
    return tuple(params)


# ---------------------------------------------------------------------------
# Pure-JAX reference (NCW, explicit left zero-pad) for correctness check.
# ---------------------------------------------------------------------------
def reference(x_ncw, params):
    w1, b1, w2, b2, w3, b3 = params

    def cconv(x, w, b):  # x: (B, Cin, T), w: (K, Cin, Cout), b: (1, Cout)
        B, Cin, T = x.shape
        K, _, Cout = w.shape
        xp = jnp.pad(x, ((0, 0), (0, 0), (K - 1, 0)))
        out = jnp.zeros((B, Cout, T), jnp.float32)
        for k in range(K):
            out = out + jnp.einsum("bct,cd->bdt", xp[:, :, k:k + T], w[k])
        return out + b.reshape(1, Cout, 1)

    def elu(v, a):
        return jnp.where(v > 0, v, a * (jnp.exp(v) - 1.0))

    h = elu(cconv(x_ncw, w1, b1), 0.9)
    h = elu(cconv(h, w2, b2), 0.8)
    h = elu(cconv(h, w3, b3), 0.7)
    return jnp.mean(h, axis=2)                    # avg_pool1d(T) + squeeze


if __name__ == "__main__":
    classes, B, T = 4, 2, 16
    key = jax.random.PRNGKey(0)
    kx, kp = jax.random.split(key)

    params = init_params(kp, classes, len(DOMAINS))
    x = jax.random.normal(kx, (B, classes, T), jnp.float32)   # NCW like PyTorch

    ref = reference(x, params)

    # 1) Exact-math path (f32 MXU operands) — tight check against the reference.
    out_f32 = jax.block_until_ready(
        domain_classifier(x, params, matmul_dtype=jnp.float32))
    assert out_f32.shape == (B, len(DOMAINS)), out_f32.shape
    assert jnp.allclose(out_f32, ref, rtol=1e-4, atol=1e-4), (out_f32, ref)

    # 2) Default fast path (bf16 MXU operands, f32 accumulation) — bf16 tolerance.
    out_bf16 = jax.block_until_ready(domain_classifier(x, params))
    assert out_bf16.shape == (B, len(DOMAINS)), out_bf16.shape
    assert jnp.allclose(out_bf16, ref, rtol=3e-2, atol=3e-2), (out_bf16, ref)

    # 3) Multi-tile T path (exercises the halo carry across T tiles).
    T2 = 64
    x2 = jax.random.normal(jax.random.fold_in(kx, 1), (B, classes, T2), jnp.float32)
    ref2 = reference(x2, params)
    out2 = jax.block_until_ready(
        domain_classifier(x2, params, matmul_dtype=jnp.float32, max_tile_t=16))
    assert jnp.allclose(out2, ref2, rtol=1e-4, atol=1e-4), (out2, ref2)

    print("KERNEL_OK")
</pallas_src>

<mosaic_0001>
module attributes {stable_mosaic.version = 11 : i64} {
  func.func @_domain_classifier_kernel(%arg0: i32, %arg1: i32, %arg2: memref<1x16x4xf32, #tpu.memory_space<vmem>>, %arg3: memref<12x16xf32, #tpu.memory_space<vmem>>, %arg4: memref<1x16xf32, #tpu.memory_space<vmem>>, %arg5: memref<48x32xf32, #tpu.memory_space<vmem>>, %arg6: memref<1x32xf32, #tpu.memory_space<vmem>>, %arg7: memref<96x5xf32, #tpu.memory_space<vmem>>, %arg8: memref<1x5xf32, #tpu.memory_space<vmem>>, %arg9: memref<1x1x5xf32, #tpu.memory_space<vmem>>, %arg10: memref<2x4xf32, #tpu.memory_space<vmem>>, %arg11: memref<2x16xf32, #tpu.memory_space<vmem>>, %arg12: memref<2x32xf32, #tpu.memory_space<vmem>>) attributes {dimension_semantics = [#tpu.dimension_semantics<parallel>, #tpu.dimension_semantics<arbitrary>], iteration_bounds = array<i64: 2, 1>, scalar_prefetch = 0 : i64, scratch_operands = 3 : i64, tpu.core_type = #tpu.core_type<tc>, window_params = [{transform_indices = @transform_0, window_bounds = array<i64: 1, 16, 4>}, {pipeline_mode = #tpu.pipeline_mode<synchronous>, transform_indices = @transform_1, window_bounds = array<i64: 12, 16>}, {pipeline_mode = #tpu.pipeline_mode<synchronous>, transform_indices = @transform_2, window_bounds = array<i64: 1, 16>}, {pipeline_mode = #tpu.pipeline_mode<synchronous>, transform_indices = @transform_3, window_bounds = array<i64: 48, 32>}, {pipeline_mode = #tpu.pipeline_mode<synchronous>, transform_indices = @transform_4, window_bounds = array<i64: 1, 32>}, {pipeline_mode = #tpu.pipeline_mode<synchronous>, transform_indices = @transform_5, window_bounds = array<i64: 96, 5>}, {pipeline_mode = #tpu.pipeline_mode<synchronous>, transform_indices = @transform_6, window_bounds = array<i64: 1, 5>}, {transform_indices = @transform_7, window_bounds = array<i64: 1, 1, 5>}]} {
    %c0_i32 = arith.constant 0 : i32
    %0 = arith.cmpi eq, %arg1, %c0_i32 : i32
    %1 = arith.extui %0 : i1 to i32
    %c0_i32_0 = arith.constant 0 : i32
    %2 = arith.cmpi ne, %1, %c0_i32_0 : i32
    scf.if %2 {
      %cst_50 = arith.constant 0.000000e+00 : f32
      %85 = vector.broadcast %cst_50 : f32 to vector<2x4xf32>
      %c0_51 = arith.constant 0 : index
      %c0_52 = arith.constant 0 : index
      %86 = vector.load %arg10[%c0_51, %c0_52] : memref<2x4xf32, #tpu.memory_space<vmem>>, vector<2x4xf32>
      tpu.vector_store %arg10[%c0_51, %c0_52], %85 {strides = array<i32>} : memref<2x4xf32, #tpu.memory_space<vmem>>, vector<2x4xf32>,
      %cst_53 = arith.constant 0.000000e+00 : f32
      %87 = vector.broadcast %cst_53 : f32 to vector<2x16xf32>
      %c0_54 = arith.constant 0 : index
      %c0_55 = arith.constant 0 : index
      %88 = vector.load %arg11[%c0_54, %c0_55] : memref<2x16xf32, #tpu.memory_space<vmem>>, vector<2x16xf32>
      tpu.vector_store %arg11[%c0_54, %c0_55], %87 {strides = array<i32>} : memref<2x16xf32, #tpu.memory_space<vmem>>, vector<2x16xf32>,
      %cst_56 = arith.constant 0.000000e+00 : f32
      %89 = vector.broadcast %cst_56 : f32 to vector<2x32xf32>
      %c0_57 = arith.constant 0 : index
      %c0_58 = arith.constant 0 : index
      %90 = vector.load %arg12[%c0_57, %c0_58] : memref<2x32xf32, #tpu.memory_space<vmem>>, vector<2x32xf32>
      tpu.vector_store %arg12[%c0_57, %c0_58], %89 {strides = array<i32>} : memref<2x32xf32, #tpu.memory_space<vmem>>, vector<2x32xf32>,
      %cst_59 = arith.constant 0.000000e+00 : f32
      %91 = vector.broadcast %cst_59 : f32 to vector<1x5xf32>
      %c0_60 = arith.constant 0 : index
      %c0_61 = arith.constant 0 : index
      %c0_62 = arith.constant 0 : index
      %92 = vector.load %arg9[%c0_60, %c0_61, %c0_62] : memref<1x1x5xf32, #tpu.memory_space<vmem>>, vector<1x1x5xf32>
      %93 = vector.shape_cast %92 : vector<1x1x5xf32> to vector<1x5xf32>
      %94 = vector.shape_cast %91 : vector<1x5xf32> to vector<1x1x5xf32>
      tpu.vector_store %arg9[%c0_60, %c0_61, %c0_62], %94 {strides = array<i32>} : memref<1x1x5xf32, #tpu.memory_space<vmem>>, vector<1x1x5xf32>,
    } else {
    }
    %c0 = arith.constant 0 : index
    %c0_1 = arith.constant 0 : index
    %c0_2 = arith.constant 0 : index
    %3 = vector.load %arg2[%c0, %c0_1, %c0_2] : memref<1x16x4xf32, #tpu.memory_space<vmem>>, vector<1x16x4xf32>
    %4 = vector.shape_cast %3 : vector<1x16x4xf32> to vector<16x4xf32>
    %c0_3 = arith.constant 0 : index
    %c0_4 = arith.constant 0 : index
    %5 = vector.load %arg10[%c0_3, %c0_4] : memref<2x4xf32, #tpu.memory_space<vmem>>, vector<2x4xf32>
    %6 = vector.extract_strided_slice %4 {offsets = [14, 0], sizes = [2, 4], strides = [1, 1]} : vector<16x4xf32> to vector<2x4xf32>
    %c0_5 = arith.constant 0 : index
    %c0_6 = arith.constant 0 : index
    %7 = vector.load %arg10[%c0_5, %c0_6] : memref<2x4xf32, #tpu.memory_space<vmem>>, vector<2x4xf32>
    tpu.vector_store %arg10[%c0_5, %c0_6], %6 {strides = array<i32>} : memref<2x4xf32, #tpu.memory_space<vmem>>, vector<2x4xf32>,
    %8 = tpu.concatenate %5, %4 in 0 : vector<2x4xf32>, vector<16x4xf32> -> vector<18x4xf32>
    %9 = vector.extract_strided_slice %8 {offsets = [0, 0], sizes = [16, 4], strides = [1, 1]} : vector<18x4xf32> to vector<16x4xf32>
    %10 = vector.extract_strided_slice %8 {offsets = [1, 0], sizes = [16, 4], strides = [1, 1]} : vector<18x4xf32> to vector<16x4xf32>
    %11 = vector.extract_strided_slice %8 {offsets = [2, 0], sizes = [16, 4], strides = [1, 1]} : vector<18x4xf32> to vector<16x4xf32>
    %12 = tpu.concatenate %9, %10, %11 in 1 : vector<16x4xf32>, vector<16x4xf32>, vector<16x4xf32> -> vector<16x12xf32>
    %c0_7 = arith.constant 0 : index
    %c0_8 = arith.constant 0 : index
    %13 = vector.load %arg3[%c0_7, %c0_8] : memref<12x16xf32, #tpu.memory_space<vmem>>, vector<12x16xf32>
    %cst = arith.constant dense<0.000000e+00> : vector<16x16xf32>
    %14 = tpu.matmul %12, %13, %cst {dimension_numbers = #tpu.dot_dimension_numbers<[1], [0], [0], [1], [0, 0, 1, 1], [], []>} : vector<16x12xf32>, vector<12x16xf32>, vector<16x16xf32> -> vector<16x16xf32>
    %c0_9 = arith.constant 0 : index
    %c0_10 = arith.constant 0 : index
    %15 = vector.load %arg4[%c0_9, %c0_10] : memref<1x16xf32, #tpu.memory_space<vmem>>, vector<1x16xf32>
    %16 = vector.broadcast %15 : vector<1x16xf32> to vector<16x16xf32>
    %17 = arith.addf %14, %16 : vector<16x16xf32>
    %cst_11 = arith.constant 0.000000e+00 : f32
    %18 = vector.broadcast %cst_11 : f32 to vector<16x16xf32>
    %19 = arith.cmpf ogt, %17, %18 : vector<16x16xf32>
    %cst_12 = arith.constant 0.000000e+00 : f32
    %20 = vector.broadcast %cst_12 : f32 to vector<16x16xf32>
    %21 = arith.minimumf %17, %20 : vector<16x16xf32>
    %22 = math.exp %21 : vector<16x16xf32>
    %cst_13 = arith.constant 1.000000e+00 : f32
    %23 = vector.broadcast %cst_13 : f32 to vector<16x16xf32>
    %24 = arith.subf %22, %23 : vector<16x16xf32>
    %cst_14 = arith.constant 0.899999976 : f32
    %25 = vector.broadcast %cst_14 : f32 to vector<16x16xf32>
    %26 = arith.mulf %25, %24 : vector<16x16xf32>
    %27 = arith.select %19, %17, %26 : vector<16x16xi1>, vector<16x16xf32>
    %c0_15 = arith.constant 0 : index
    %c0_16 = arith.constant 0 : index
    %28 = vector.load %arg11[%c0_15, %c0_16] : memref<2x16xf32, #tpu.memory_space<vmem>>, vector<2x16xf32>
    %29 = vector.extract_strided_slice %27 {offsets = [14, 0], sizes = [2, 16], strides = [1, 1]} : vector<16x16xf32> to vector<2x16xf32>
    %c0_17 = arith.constant 0 : index
    %c0_18 = arith.constant 0 : index
    %30 = vector.load %arg11[%c0_17, %c0_18] : memref<2x16xf32, #tpu.memory_space<vmem>>, vector<2x16xf32>
    tpu.vector_store %arg11[%c0_17, %c0_18], %29 {strides = array<i32>} : memref<2x16xf32, #tpu.memory_space<vmem>>, vector<2x16xf32>,
    %31 = tpu.concatenate %28, %27 in 0 : vector<2x16xf32>, vector<16x16xf32> -> vector<18x16xf32>
    %32 = vector.extract_strided_slice %31 {offsets = [0, 0], sizes = [16, 16], strides = [1, 1]} : vector<18x16xf32> to vector<16x16xf32>
    %33 = vector.extract_strided_slice %31 {offsets = [1, 0], sizes = [16, 16], strides = [1, 1]} : vector<18x16xf32> to vector<16x16xf32>
    %34 = vector.extract_strided_slice %31 {offsets = [2, 0], sizes = [16, 16], strides = [1, 1]} : vector<18x16xf32> to vector<16x16xf32>
    %35 = tpu.concatenate %32, %33, %34 in 1 : vector<16x16xf32>, vector<16x16xf32>, vector<16x16xf32> -> vector<16x48xf32>
    %c0_19 = arith.constant 0 : index
    %c0_20 = arith.constant 0 : index
    %36 = vector.load %arg5[%c0_19, %c0_20] : memref<48x32xf32, #tpu.memory_space<vmem>>, vector<48x32xf32>
    %cst_21 = arith.constant dense<0.000000e+00> : vector<16x32xf32>
    %37 = tpu.matmul %35, %36, %cst_21 {dimension_numbers = #tpu.dot_dimension_numbers<[1], [0], [0], [1], [0, 0, 1, 1], [], []>} : vector<16x48xf32>, vector<48x32xf32>, vector<16x32xf32> -> vector<16x32xf32>
    %c0_22 = arith.constant 0 : index
    %c0_23 = arith.constant 0 : index
    %38 = vector.load %arg6[%c0_22, %c0_23] : memref<1x32xf32, #tpu.memory_space<vmem>>, vector<1x32xf32>
    %39 = vector.broadcast %38 : vector<1x32xf32> to vector<16x32xf32>
    %40 = arith.addf %37, %39 : vector<16x32xf32>
    %cst_24 = arith.constant 0.000000e+00 : f32
    %41 = vector.broadcast %cst_24 : f32 to vector<16x32xf32>
    %42 = arith.cmpf ogt, %40, %41 : vector<16x32xf32>
    %cst_25 = arith.constant 0.000000e+00 : f32
    %43 = vector.broadcast %cst_25 : f32 to vector<16x32xf32>
    %44 = arith.minimumf %40, %43 : vector<16x32xf32>
    %45 = math.exp %44 : vector<16x32xf32>
    %cst_26 = arith.constant 1.000000e+00 : f32
    %46 = vector.broadcast %cst_26 : f32 to vector<16x32xf32>
    %47 = arith.subf %45, %46 : vector<16x32xf32>
    %cst_27 = arith.constant 8.000000e-01 : f32
    %48 = vector.broadcast %cst_27 : f32 to vector<16x32xf32>
    %49 = arith.mulf %48, %47 : vector<16x32xf32>
    %50 = arith.select %42, %40, %49 : vector<16x32xi1>, vector<16x32xf32>
    %c0_28 = arith.constant 0 : index
    %c0_29 = arith.constant 0 : index
    %51 = vector.load %arg12[%c0_28, %c0_29] : memref<2x32xf32, #tpu.memory_space<vmem>>, vector<2x32xf32>
    %52 = vector.extract_strided_slice %50 {offsets = [14, 0], sizes = [2, 32], strides = [1, 1]} : vector<16x32xf32> to vector<2x32xf32>
    %c0_30 = arith.constant 0 : index
    %c0_31 = arith.constant 0 : index
    %53 = vector.load %arg12[%c0_30, %c0_31] : memref<2x32xf32, #tpu.memory_space<vmem>>, vector<2x32xf32>
    tpu.vector_store %arg12[%c0_30, %c0_31], %52 {strides = array<i32>} : memref<2x32xf32, #tpu.memory_space<vmem>>, vector<2x32xf32>,
    %54 = tpu.concatenate %51, %50 in 0 : vector<2x32xf32>, vector<16x32xf32> -> vector<18x32xf32>
    %55 = vector.extract_strided_slice %54 {offsets = [0, 0], sizes = [16, 32], strides = [1, 1]} : vector<18x32xf32> to vector<16x32xf32>
    %56 = vector.extract_strided_slice %54 {offsets = [1, 0], sizes = [16, 32], strides = [1, 1]} : vector<18x32xf32> to vector<16x32xf32>
    %57 = vector.extract_strided_slice %54 {offsets = [2, 0], sizes = [16, 32], strides = [1, 1]} : vector<18x32xf32> to vector<16x32xf32>
    %58 = tpu.concatenate %55, %56, %57 in 1 : vector<16x32xf32>, vector<16x32xf32>, vector<16x32xf32> -> vector<16x96xf32>
    %c0_32 = arith.constant 0 : index
    %c0_33 = arith.constant 0 : index
    %59 = vector.load %arg7[%c0_32, %c0_33] : memref<96x5xf32, #tpu.memory_space<vmem>>, vector<96x5xf32>
    %cst_34 = arith.constant dense<0.000000e+00> : vector<16x5xf32>
    %60 = tpu.matmul %58, %59, %cst_34 {dimension_numbers = #tpu.dot_dimension_numbers<[1], [0], [0], [1], [0, 0, 1, 1], [], []>} : vector<16x96xf32>, vector<96x5xf32>, vector<16x5xf32> -> vector<16x5xf32>
    %c0_35 = arith.constant 0 : index
    %c0_36 = arith.constant 0 : index
    %61 = vector.load %arg8[%c0_35, %c0_36] : memref<1x5xf32, #tpu.memory_space<vmem>>, vector<1x5xf32>
    %62 = vector.broadcast %61 : vector<1x5xf32> to vector<16x5xf32>
    %63 = arith.addf %60, %62 : vector<16x5xf32>
    %cst_37 = arith.constant 0.000000e+00 : f32
    %64 = vector.broadcast %cst_37 : f32 to vector<16x5xf32>
    %65 = arith.cmpf ogt, %63, %64 : vector<16x5xf32>
    %cst_38 = arith.constant 0.000000e+00 : f32
    %66 = vector.broadcast %cst_38 : f32 to vector<16x5xf32>
    %67 = arith.minimumf %63, %66 : vector<16x5xf32>
    %68 = math.exp %67 : vector<16x5xf32>
    %cst_39 = arith.constant 1.000000e+00 : f32
    %69 = vector.broadcast %cst_39 : f32 to vector<16x5xf32>
    %70 = arith.subf %68, %69 : vector<16x5xf32>
    %cst_40 = arith.constant 0.699999988 : f32
    %71 = vector.broadcast %cst_40 : f32 to vector<16x5xf32>
    %72 = arith.mulf %71, %70 : vector<16x5xf32>
    %73 = arith.select %65, %63, %72 : vector<16x5xi1>, vector<16x5xf32>
    %c0_41 = arith.constant 0 : index
    %c0_42 = arith.constant 0 : index
    %c0_43 = arith.constant 0 : index
    %74 = vector.load %arg9[%c0_41, %c0_42, %c0_43] : memref<1x1x5xf32, #tpu.memory_space<vmem>>, vector<1x1x5xf32>
    %75 = vector.shape_cast %74 : vector<1x1x5xf32> to vector<1x5xf32>
    %cst_44 = arith.constant dense<0.000000e+00> : vector<5xf32>
    %76 = vector.multi_reduction <add>, %73, %cst_44 [0] : vector<16x5xf32> to vector<5xf32>
    %77 = vector.shape_cast %76 : vector<5xf32> to vector<1x5xf32>
    %78 = arith.addf %75, %77 : vector<1x5xf32>
    %c0_45 = arith.constant 0 : index
    %c0_46 = arith.constant 0 : index
    %c0_47 = arith.constant 0 : index
    %79 = vector.load %arg9[%c0_45, %c0_46, %c0_47] : memref<1x1x5xf32, #tpu.memory_space<vmem>>, vector<1x1x5xf32>
    %80 = vector.shape_cast %79 : vector<1x1x5xf32> to vector<1x5xf32>
    %81 = vector.shape_cast %78 : vector<1x5xf32> to vector<1x1x5xf32>
    tpu.vector_store %arg9[%c0_45, %c0_46, %c0_47], %81 {strides = array<i32>} : memref<1x1x5xf32, #tpu.memory_space<vmem>>, vector<1x1x5xf32>,
    %c0_i32_48 = arith.constant 0 : i32
    %82 = arith.cmpi eq, %arg1, %c0_i32_48 : i32
    %83 = arith.extui %82 : i1 to i32
    %c0_i32_49 = arith.constant 0 : i32
    %84 = arith.cmpi ne, %83, %c0_i32_49 : i32
    scf.if %84 {
      %c0_50 = arith.constant 0 : index
      %c0_51 = arith.constant 0 : index
      %c0_52 = arith.constant 0 : index
      %85 = vector.load %arg9[%c0_50, %c0_51, %c0_52] : memref<1x1x5xf32, #tpu.memory_space<vmem>>, vector<1x1x5xf32>
      %86 = vector.shape_cast %85 : vector<1x1x5xf32> to vector<1x5xf32>
      %cst_53 = arith.constant 6.250000e-02 : f32
      %87 = vector.broadcast %cst_53 : f32 to vector<1x5xf32>
      %88 = arith.mulf %86, %87 : vector<1x5xf32>
      %c0_54 = arith.constant 0 : index
      %c0_55 = arith.constant 0 : index
      %c0_56 = arith.constant 0 : index
      %89 = vector.load %arg9[%c0_54, %c0_55, %c0_56] : memref<1x1x5xf32, #tpu.memory_space<vmem>>, vector<1x1x5xf32>
      %90 = vector.shape_cast %89 : vector<1x1x5xf32> to vector<1x5xf32>
      %91 = vector.shape_cast %88 : vector<1x5xf32> to vector<1x1x5xf32>
      tpu.vector_store %arg9[%c0_54, %c0_55, %c0_56], %91 {strides = array<i32>} : memref<1x1x5xf32, #tpu.memory_space<vmem>>, vector<1x1x5xf32>,
    } else {
    }
    return
  }
  func.func @transform_0(%arg0: i32, %arg1: i32) -> (i32, i32, i32) {
    %c0_i32 = arith.constant 0 : i32
    %c0_i32_0 = arith.constant 0 : i32
    return %arg0, %arg1, %c0_i32 : i32, i32, i32
  }
  func.func @transform_1(%arg0: i32, %arg1: i32) -> (i32, i32) {
    %c0_i32 = arith.constant 0 : i32
    %c0_i32_0 = arith.constant 0 : i32
    %c0_i32_1 = arith.constant 0 : i32
    return %c0_i32, %c0_i32_0 : i32, i32
  }
  func.func @transform_2(%arg0: i32, %arg1: i32) -> (i32, i32) {
    %c0_i32 = arith.constant 0 : i32
    %c0_i32_0 = arith.constant 0 : i32
    %c0_i32_1 = arith.constant 0 : i32
    return %c0_i32, %c0_i32_0 : i32, i32
  }
  func.func @transform_3(%arg0: i32, %arg1: i32) -> (i32, i32) {
    %c0_i32 = arith.constant 0 : i32
    %c0_i32_0 = arith.constant 0 : i32
    %c0_i32_1 = arith.constant 0 : i32
    return %c0_i32, %c0_i32_0 : i32, i32
  }
  func.func @transform_4(%arg0: i32, %arg1: i32) -> (i32, i32) {
    %c0_i32 = arith.constant 0 : i32
    %c0_i32_0 = arith.constant 0 : i32
    %c0_i32_1 = arith.constant 0 : i32
    return %c0_i32, %c0_i32_0 : i32, i32
  }
  func.func @transform_5(%arg0: i32, %arg1: i32) -> (i32, i32) {
    %c0_i32 = arith.constant 0 : i32
    %c0_i32_0 = arith.constant 0 : i32
    %c0_i32_1 = arith.constant 0 : i32
    return %c0_i32, %c0_i32_0 : i32, i32
  }
  func.func @transform_6(%arg0: i32, %arg1: i32) -> (i32, i32) {
    %c0_i32 = arith.constant 0 : i32
    %c0_i32_0 = arith.constant 0 : i32
    %c0_i32_1 = arith.constant 0 : i32
    return %c0_i32, %c0_i32_0 : i32, i32
  }
  func.func @transform_7(%arg0: i32, %arg1: i32) -> (i32, i32, i32) {
    %c0_i32 = arith.constant 0 : i32
    %c0_i32_0 = arith.constant 0 : i32
    %c0_i32_1 = arith.constant 0 : i32
    return %arg0, %c0_i32, %c0_i32_0 : i32, i32, i32
  }
}

</mosaic_0001>

<llo_original>
// kernel: tpu_custom_call.1
$region0: #{tpu_custom_call.1}
  #allocation0 [shape = 'u32[]', space=smem, size = 0x4, offset = 0x4, fixed_abs, tag = 'smem constant byte address 0x4 - core index']
  #allocation1 [shape = 'u32[144,128]{1,0:T(1,128)}', space=vmem, size = 0x12000, scoped, tag = 'internal scratch']
  #allocation2 [shape = 'f32[2,4]{1,0:T(2,128)}', space=vmem, size = 0x400, scoped, tag = 'scratch operand']
  #allocation3 [shape = 'f32[2,16]{1,0:T(2,128)}', space=vmem, size = 0x400, scoped, tag = 'scratch operand']
  #allocation4 [shape = 'f32[2,32]{1,0:T(2,128)}', space=vmem, size = 0x400, scoped, tag = 'scratch operand']
  %s0 = inlined_call_operand.vmem [shape: f32[2,16,4], index: 0, kind: input, shape index: {}]
  %s1 = inlined_call_operand.vmem [shape: f32[12,16], index: 1, kind: input, shape index: {}]
  %s2 = inlined_call_operand.vmem [shape: f32[1,16], index: 2, kind: input, shape index: {}]
  %s3 = inlined_call_operand.vmem [shape: f32[48,32], index: 3, kind: input, shape index: {}]
  %s4 = inlined_call_operand.vmem [shape: f32[1,32], index: 4, kind: input, shape index: {}]
  %s5 = inlined_call_operand.vmem [shape: f32[96,5], index: 5, kind: input, shape index: {}]
  %s6 = inlined_call_operand.vmem [shape: f32[1,5], index: 6, kind: input, shape index: {}]
  %s7 = inlined_call_operand.hbm [shape: f32[2,1,5], index: 7, kind: output, shape index: {}]
  %s8 = sld [smem:[#allocation0]]
  $region69: #{tpu_custom_call.1} parent=0
    _
  %s10 = ssub.s32 1, %s8
  %s11 = scalar_select 0, %s10, %s8
  $region1: #{tpu_custom_call.1} parent=0
    #allocation5 [shape = 'u8[1024]{0}', space=vmem, size = 0x400, scoped, tag = 'output window, operand 0']
    #allocation6 [shape = 's32[2]{0}', space=sflag, size = 0x8, scoped, tag = 'scoped memory for tpu_custom_call.1']
    %12 = vsyncpa [#allocation6], 0
    %s13 = scalar_lea.sflag [#allocation6], 1
    %14 = vsyncpa %s13, 0
    loop: start=0, step=1, limit=4
    $region2: #{tpu_custom_call.1} parent=1 // loop_pre_header
      _
    $region3: #{tpu_custom_call.1} parent=1 // loop_header
      %s16 = sphi 0, %s20
      %p17 = scmp.ge.s32.totalorder %s16, 4
      %s23 = sphi 0, %s35
      %s24 = sphi 0, %s31
      %s25 = sphi 0, %s23
      %s26 = sphi 0, %s24
      %s27 = sphi 0, %s25
      %s28 = sphi 0, %s26
      %s40 = sphi 0, %s42
      %s43 = sphi 0, %s40
      %s44 = sphi 0, %s43
      %s60 = sphi 0, %s44
      %s64 = sphi 0, %s64
      %s66 = sphi 0, %s64
      %s67 = sphi 0, %s66
      %s81 = sphi 0, %s67
      %s85 = sphi 0, %s85
      %s87 = sphi 0, %s85
      %s88 = sphi 0, %s87
      %s102 = sphi 0, %s88
      %s106 = sphi 0, %s106
      %s108 = sphi 0, %s106
      %s109 = sphi 0, %s108
      %s123 = sphi 0, %s109
      %s127 = sphi 0, %s127
      %s129 = sphi 0, %s127
      %s130 = sphi 0, %s129
      %s144 = sphi 0, %s130
      %s148 = sphi 0, %s148
      %s150 = sphi 0, %s148
      %s151 = sphi 0, %s150
      %s165 = sphi 0, %s151
      %s169 = sphi 0, %s169
      %s171 = sphi 0, %s169
      %s172 = sphi 0, %s171
      %s186 = sphi 0, %s172
      %s192 = sphi 0, %s194
      %s195 = sphi 0, %s192
      %s196 = sphi 0, %s195
      %s212 = sphi 0, %s196
    $region4: #{tpu_custom_call.1} parent=1 // loop_header_branch
      %19 = sbr.rel (%p17) target = $region8
    $region5: #{tpu_custom_call.1} parent=1 // loop_body
      %s21 = ssub.s32 %s16, 1
      %s22 = ssub.s32 %s16, 2
      %s29 = sadd.s32 1, %s24
      %p30 = scmp.ge.s32.totalorder %s29, 1
      %s31 = scalar_select %p30, 0, %s29
      %s32 = sadd.s32 1, %s23
      %s33 = scalar_select %p30, %s32, %s23
      %p34 = scmp.ge.s32.totalorder %s33, 2
      %s35 = scalar_select %p34, 0, %s33
      %s36 = ssub.s32 %s23, %s35
      %s37 = ssub.s32 %s24, %s31
      %s38 = sor.u32 %s36, %s37
      %p39 = scmp.eq.s32.totalorder %s38, 0
      %s41 = sadd.s32 %s40, 1
      %s42 = scalar_select %p39, %s40, %s41
      %p45 = pneg %p39
      %p46 = scmp.eq.s32.totalorder %s16, 1
      %p47 = por %p45, %p46
      %p48 = scmp.ne.s32.totalorder %s40, %s43
      %p49 = scmp.eq.s32.totalorder %s16, 0
      %p50 = por %p48, %p49
      %p51 = scmp.ne.s32.totalorder %s40, %s43
      %p52 = scmp.eq.s32.totalorder %s21, 1
      %p53 = por %p51, %p52
      %p54 = scmp.ne.s32.totalorder %s43, %s44
      %p55 = scmp.eq.s32.totalorder %s21, 0
      %p56 = por %p54, %p55
      %p57 = scmp.ne.s32.totalorder %s43, %s44
      %p58 = scmp.eq.s32.totalorder %s22, 1
      %p59 = por %p57, %p58
      %p61 = scmp.ne.s32.totalorder %s44, %s60
      %p62 = scmp.eq.s32.totalorder %s22, 0
      %p63 = por %p61, %p62
      %s65 = sadd.s32 %s64, 1
      %p68 = scmp.eq.s32.totalorder %s16, 1
      %p69 = scmp.ne.s32.totalorder %s64, %s66
      %p70 = scmp.eq.s32.totalorder %s16, 0
      %p71 = por %p69, %p70
      %p72 = scmp.ne.s32.totalorder %s64, %s66
      %p73 = scmp.eq.s32.totalorder %s21, 1
      %p74 = por %p72, %p73
      %p75 = scmp.ne.s32.totalorder %s66, %s67
      %p76 = scmp.eq.s32.totalorder %s21, 0
      %p77 = por %p75, %p76
      %p78 = scmp.ne.s32.totalorder %s66, %s67
      %p79 = scmp.eq.s32.totalorder %s22, 1
      %p80 = por %p78, %p79
      %p82 = scmp.ne.s32.totalorder %s67, %s81
      %p83 = scmp.eq.s32.totalorder %s22, 0
      %p84 = por %p82, %p83
      %s86 = sadd.s32 %s85, 1
      %p89 = scmp.eq.s32.totalorder %s16, 1
      %p90 = scmp.ne.s32.totalorder %s85, %s87
      %p91 = scmp.eq.s32.totalorder %s16, 0
      %p92 = por %p90, %p91
      %p93 = scmp.ne.s32.totalorder %s85, %s87
      %p94 = scmp.eq.s32.totalorder %s21, 1
      %p95 = por %p93, %p94
      %p96 = scmp.ne.s32.totalorder %s87, %s88
      %p97 = scmp.eq.s32.totalorder %s21, 0
      %p98 = por %p96, %p97
      %p99 = scmp.ne.s32.totalorder %s87, %s88
      %p100 = scmp.eq.s32.totalorder %s22, 1
      %p101 = por %p99, %p100
      %p103 = scmp.ne.s32.totalorder %s88, %s102
      %p104 = scmp.eq.s32.totalorder %s22, 0
      %p105 = por %p103, %p104
      %s107 = sadd.s32 %s106, 1
      %p110 = scmp.eq.s32.totalorder %s16, 1
      %p111 = scmp.ne.s32.totalorder %s106, %s108
      %p112 = scmp.eq.s32.totalorder %s16, 0
      %p113 = por %p111, %p112
      %p114 = scmp.ne.s32.totalorder %s106, %s108
      %p115 = scmp.eq.s32.totalorder %s21, 1
      %p116 = por %p114, %p115
      %p117 = scmp.ne.s32.totalorder %s108, %s109
      %p118 = scmp.eq.s32.totalorder %s21, 0
      %p119 = por %p117, %p118
      %p120 = scmp.ne.s32.totalorder %s108, %s109
      %p121 = scmp.eq.s32.totalorder %s22, 1
      %p122 = por %p120, %p121
      %p124 = scmp.ne.s32.totalorder %s109, %s123
      %p125 = scmp.eq.s32.totalorder %s22, 0
      %p126 = por %p124, %p125
      %s128 = sadd.s32 %s127, 1
      %p131 = scmp.eq.s32.totalorder %s16, 1
      %p132 = scmp.ne.s32.totalorder %s127, %s129
      %p133 = scmp.eq.s32.totalorder %s16, 0
      %p134 = por %p132, %p133
      %p135 = scmp.ne.s32.totalorder %s127, %s129
      %p136 = scmp.eq.s32.totalorder %s21, 1
      %p137 = por %p135, %p136
      %p138 = scmp.ne.s32.totalorder %s129, %s130
      %p139 = scmp.eq.s32.totalorder %s21, 0
      %p140 = por %p138, %p139
      %p141 = scmp.ne.s32.totalorder %s129, %s130
      %p142 = scmp.eq.s32.totalorder %s22, 1
      %p143 = por %p141, %p142
      %p145 = scmp.ne.s32.totalorder %s130, %s144
      %p146 = scmp.eq.s32.totalorder %s22, 0
      %p147 = por %p145, %p146
      %s149 = sadd.s32 %s148, 1
      %p152 = scmp.eq.s32.totalorder %s16, 1
      %p153 = scmp.ne.s32.totalorder %s148, %s150
      %p154 = scmp.eq.s32.totalorder %s16, 0
      %p155 = por %p153, %p154
      %p156 = scmp.ne.s32.totalorder %s148, %s150
      %p157 = scmp.eq.s32.totalorder %s21, 1
      %p158 = por %p156, %p157
      %p159 = scmp.ne.s32.totalorder %s150, %s151
      %p160 = scmp.eq.s32.totalorder %s21, 0
      %p161 = por %p159, %p160
      %p162 = scmp.ne.s32.totalorder %s150, %s151
      %p163 = scmp.eq.s32.totalorder %s22, 1
      %p164 = por %p162, %p163
      %p166 = scmp.ne.s32.totalorder %s151, %s165
      %p167 = scmp.eq.s32.totalorder %s22, 0
      %p168 = por %p166, %p167
      %s170 = sadd.s32 %s169, 1
      %p173 = scmp.eq.s32.totalorder %s16, 1
      %p174 = scmp.ne.s32.totalorder %s169, %s171
      %p175 = scmp.eq.s32.totalorder %s16, 0
      %p176 = por %p174, %p175
      %p177 = scmp.ne.s32.totalorder %s169, %s171
      %p178 = scmp.eq.s32.totalorder %s21, 1
      %p179 = por %p177, %p178
      %p180 = scmp.ne.s32.totalorder %s171, %s172
      %p181 = scmp.eq.s32.totalorder %s21, 0
      %p182 = por %p180, %p181
      %p183 = scmp.ne.s32.totalorder %s171, %s172
      %p184 = scmp.eq.s32.totalorder %s22, 1
      %p185 = por %p183, %p184
      %p187 = scmp.ne.s32.totalorder %s172, %s186
      %p188 = scmp.eq.s32.totalorder %s22, 0
      %p189 = por %p187, %p188
      %s190 = ssub.s32 %s23, %s35
      %p191 = scmp.eq.s32.totalorder %s190, 0
      %s193 = sadd.s32 %s192, 1
      %s194 = scalar_select %p191, %s192, %s193
      %p197 = pneg %p191
      %p198 = scmp.eq.s32.totalorder %s16, 1
      %p199 = por %p197, %p198
      %p200 = scmp.ne.s32.totalorder %s192, %s195
      %p201 = scmp.eq.s32.totalorder %s16, 0
      %p202 = por %p200, %p201
      %p203 = scmp.ne.s32.totalorder %s192, %s195
      %p204 = scmp.eq.s32.totalorder %s21, 1
      %p205 = por %p203, %p204
      %p206 = scmp.ne.s32.totalorder %s195, %s196
      %p207 = scmp.eq.s32.totalorder %s21, 0
      %p208 = por %p206, %p207
      %p209 = scmp.ne.s32.totalorder %s195, %s196
      %p210 = scmp.eq.s32.totalorder %s22, 1
      %p211 = por %p209, %p210
      %p213 = scmp.ne.s32.totalorder %s196, %s212
      %p214 = scmp.eq.s32.totalorder %s22, 0
      %p215 = por %p213, %p214
      %p216 = scmp.le.s32.totalorder 1, %s16
      %p217 = scmp.lt.s32.totalorder %s16, 3
      %p218 = pnand %p216, %p217
      %p219 = pneg %p218
      // Predicated region
      $region9: #{tpu_custom_call.1} parent=5 // pred_check
        _
      $region10: #{tpu_custom_call.1} parent=5 // pred_check_branch
        %221 = sbr.rel (%p218) target = $region12
      $region11: #{tpu_custom_call.1} parent=5 // pred_region
        %s222 = ssub.s32 %s16, 1
        // Predicated region
        $region13: #{tpu_custom_call.1} parent=11 // pred_check
          %p223 = pneg %p77
        $region14: #{tpu_custom_call.1} parent=11 // pred_check_branch
          %225 = sbr.rel (%p223) target = $region16
        $region15: #{tpu_custom_call.1} parent=11 // pred_region
          _
        $region16: #{tpu_custom_call.1} parent=11 // pred_fallthru
          _
        // Predicated region
        $region17: #{tpu_custom_call.1} parent=11 // pred_check
          %p226 = pneg %p98
        $region18: #{tpu_custom_call.1} parent=11 // pred_check_branch
          %228 = sbr.rel (%p226) target = $region20
        $region19: #{tpu_custom_call.1} parent=11 // pred_region
          _
        $region20: #{tpu_custom_call.1} parent=11 // pred_fallthru
          _
        // Predicated region
        $region21: #{tpu_custom_call.1} parent=11 // pred_check
          %p229 = pneg %p119
        $region22: #{tpu_custom_call.1} parent=11 // pred_check_branch
          %231 = sbr.rel (%p229) target = $region24
        $region23: #{tpu_custom_call.1} parent=11 // pred_region
          _
        $region24: #{tpu_custom_call.1} parent=11 // pred_fallthru
          _
        // Predicated region
        $region25: #{tpu_custom_call.1} parent=11 // pred_check
          %p232 = pneg %p140
        $region26: #{tpu_custom_call.1} parent=11 // pred_check_branch
          %234 = sbr.rel (%p232) target = $region28
        $region27: #{tpu_custom_call.1} parent=11 // pred_region
          _
        $region28: #{tpu_custom_call.1} parent=11 // pred_fallthru
          _
        // Predicated region
        $region29: #{tpu_custom_call.1} parent=11 // pred_check
          %p235 = pneg %p161
        $region30: #{tpu_custom_call.1} parent=11 // pred_check_branch
          %237 = sbr.rel (%p235) target = $region32
        $region31: #{tpu_custom_call.1} parent=11 // pred_region
          _
        $region32: #{tpu_custom_call.1} parent=11 // pred_fallthru
          _
        // Predicated region
        $region33: #{tpu_custom_call.1} parent=11 // pred_check
          %p238 = pneg %p182
        $region34: #{tpu_custom_call.1} parent=11 // pred_check_branch
          %240 = sbr.rel (%p238) target = $region36
        $region35: #{tpu_custom_call.1} parent=11 // pred_region
          _
        $region36: #{tpu_custom_call.1} parent=11 // pred_fallthru
          _
      $region12: #{tpu_custom_call.1} parent=5 // pred_fallthru
        _
      %p241 = scmp.lt.s32.totalorder %s16, 2
      // Predicated region
      $region37: #{tpu_custom_call.1} parent=5 // pred_check
        %p242 = pneg %p241
      $region38: #{tpu_custom_call.1} parent=5 // pred_check_branch
        %244 = sbr.rel (%p242) target = $region40
      $region39: #{tpu_custom_call.1} parent=5 // pred_region
        // Predicated region
        $region41: #{tpu_custom_call.1} parent=39 // pred_check
          %p245 = pneg %p50
        $region42: #{tpu_custom_call.1} parent=39 // pred_check_branch
          %247 = sbr.rel (%p245) target = $region44
        $region43: #{tpu_custom_call.1} parent=39 // pred_region
          %s248 = smul.u32 2, %s24
          %p249 = scmp.lt.s32.totalorder %s23, 1
          %s250 = scalar_select %p249, %s23, 1
          %p251 = scmp.lt.s32.totalorder %s248, 1
          %s252 = scalar_select %p251, %s248, 1
          %s253 = smul.addr %s250, 2
          %s254 = sadd.s32 %s252, %s253
          %s255 = smul.addr %s254, 8
          %s256 = scalar_lea.vmem %s0, %s255
          %s257 = smul.u32 2, %s24
        $region44: #{tpu_custom_call.1} parent=39 // pred_fallthru
          _
      $region40: #{tpu_custom_call.1} parent=5 // pred_fallthru
        _
      %p258 = scmp.le.s32.totalorder 1, %s16
      %p259 = scmp.lt.s32.totalorder %s16, 3
      %p260 = pnand %p258, %p259
      %p261 = pneg %p260
      // Predicated region
      $region45: #{tpu_custom_call.1} parent=5 // pred_check
        _
      $region46: #{tpu_custom_call.1} parent=5 // pred_check_branch
        %263 = sbr.rel (%p260) target = $region48
      $region47: #{tpu_custom_call.1} parent=5 // pred_region
        %s264 = ssub.s32 %s16, 1
        %s265 = smul.u32 2, %s26
        %p266 = scmp.lt.s32.totalorder %s25, 1
        %s267 = scalar_select %p266, %s25, 1
        %p268 = scmp.lt.s32.totalorder %s265, 1
        %s269 = scalar_select %p268, %s265, 1
        %s270 = smul.addr %s267, 2
        %s271 = sadd.s32 %s269, %s270
        %s272 = smul.addr %s271, 8
        %s273 = scalar_lea.vmem %s0, %s272
        %p274 = pneg %p56
        %p275 = pneg %p53
        %p276 = pneg %p77
        %p277 = pneg %p74
        %p278 = pneg %p98
        %p279 = pneg %p95
        %p280 = pneg %p119
        %p281 = pneg %p116
        %p282 = pneg %p140
        %p283 = pneg %p137
        %p284 = pneg %p161
        %p285 = pneg %p158
        %p286 = pneg %p182
        %p287 = pneg %p179
        %p288 = pneg %p208
        %p289 = pneg %p205
        %s290 = sand.u32 %s195, 1
        %s291 = scalar_lea.sflag [#allocation6], %s290
        %s292 = sand.u32 %s195, 1
        %s293 = scalar_lea.vmem [#allocation5], %s292
        %s294 = smul.u32 2, %s26
        %p295 = scmp.lt.s32.totalorder %s25, 1
        %s296 = scalar_select %p295, %s25, 1
        %p297 = scmp.lt.s32.totalorder %s294, 1
        %s298 = scalar_select %p297, %s294, 1
        %s299 = smul.addr %s296, 2
        %s300 = sadd.s32 %s298, %s299
        %s301 = smul.addr %s300, 8
        %s302 = scalar_lea.vmem %s0, %s301
        %s303 = smul.u32 2, %s26
        %p304 = scmp.eq.s32.totalorder %s26, 0
        // Predicated region
        $region49: #{tpu_custom_call.1} parent=47 // pred_check
          %p305 = pneg %p304
        $region50: #{tpu_custom_call.1} parent=47 // pred_check_branch
          %307 = sbr.rel (%p305) target = $region52
        $region51: #{tpu_custom_call.1} parent=47 // pred_region
          %vm308 = vcmask 25600
          %309 = vst.msk [vmem:[#allocation2] sm:$0x3] %vm308, 0.0
          %vm310 = vcmask 123904
          %311 = vst.msk [vmem:[#allocation3] sm:$0x3] %vm310, 0.0
          %vm312 = vcmask 254976
          %313 = vst.msk [vmem:[#allocation4] sm:$0x3] %vm312, 0.0
          %vm314 = vcmask 32768
          %315 = vst.msk [vmem:[%s293] sm:$0x1] %vm314, 0.0
        $region52: #{tpu_custom_call.1} parent=47 // pred_fallthru
          _
        %v316 = vld [vmem:[%s302] sm:$0xff]
        %v317 = vld [vmem:[%s302 + $0x8] sm:$0xff]
        %v318 = vld [vmem:[#allocation2] sm:$0x3]
        %vm319 = vcmask 31750
        %320 = vst.msk [vmem:[#allocation2 - $0x6] sm:$0xc0] %vm319, %v317
        %vm323 = vcmask 1041408
        %v324 = vrot.slane %v316, 6
        %v325 = vrot.slane %v317, 6
        %v326 = vsel %vm323, %v324, %v325
        %v329 = vsel %vm323, %v318, %v324
        %vm331 = vcmask 1046528
        %v332 = vrot.slane %v329, 1
        %v333 = vrot.slane %v326, 1
        %v334 = vsel %vm331, %v332, %v333
        %v335 = vrot.slane %v325, 1
        %v336 = vsel %vm331, %v333, %v335
        %337 = vrot.lane.b32.xlu0 %v334, 4
        %v338 = vpop.permute.xlu0 %337
        %339 = vrot.lane.b32.xlu0 %v336, 4
        %v340 = vpop.permute.xlu0 %339
        %vm343 = vcmask 1045504
        %v344 = vrot.slane %v329, 2
        %v345 = vrot.slane %v326, 2
        %v346 = vsel %vm343, %v344, %v345
        %v347 = vrot.slane %v325, 2
        %v348 = vsel %vm343, %v345, %v347
        %349 = vrot.lane.b32.xlu0 %v346, 8
        %v350 = vpop.permute.xlu0 %349
        %351 = vrot.lane.b32.xlu0 %v348, 8
        %v352 = vpop.permute.xlu0 %351
        %vm355 = vcmask 31744
        %v356 = vsel %vm355, %v329, %v338
        %v357 = vsel %vm355, %v326, %v340
        %vm358 = vcmask 64512
        %v359 = vsel %vm358, %v356, %v350
        %v360 = vsel %vm358, %v357, %v352
        %v361 = vld [vmem:[%s1] sm:$0xff]
        %v362 = vld [vmem:[%s1 + $0x8] sm:$0xf]
        %v363 = vld [vmem:[%s2] sm:$0x1]
        %v365 = vlaneseq
        %v366 = vshrl.u32 %v365, 7
        %v367 = vsub.s32 0, %v366
        %v368 = vrot.slane %v363, %v367
        %vm370 = vcmask 97280
        %v372 = vsel %vm370, %v359, 0
        %v375 = vsel %vm370, %v360, 0
        %vm377 = vcmask 1043456
        %v379 = vsel %vm377, %v362, 0
        %381 = vmatprep.subr.mxu0 0.0
        %382 = vmatpush1.msra.mxu0 0.0
        %383 = vmatprep.subr.mxu0 0.0
        %384 = vmatpush1.msra.mxu0 0.0
        %385 = vmatprep.subr.mxu0 0.0
        %386 = vmatpush1.msra.mxu0 0.0
        %387 = vmatprep.subr.mxu0 0.0
        %388 = vmatpush1.msra.mxu0 0.0
        %389 = vmatprep.subr.mxu0 0.0
        %390 = vmatpush1.msra.mxu0 0.0
        %391 = vmatprep.subr.mxu0 0.0
        %392 = vmatpush1.msra.mxu0 0.0
        %393 = vmatprep.subr.mxu0 0.0
        %394 = vmatpush1.msra.mxu0 0.0
        %395 = vmatprep.subr.mxu0 0.0
        %396 = vmatpush1.msra.mxu0 0.0
        %397 = vmatprep.subr.mxu0 0.0
        %398 = vmatpush1.msra.mxu0 0.0
        %399 = vmatprep.subr.mxu0 0.0
        %400 = vmatpush1.msra.mxu0 0.0
        %401 = vmatprep.subr.mxu0 0.0
        %402 = vmatpush1.msra.mxu0 0.0
        %403 = vmatprep.subr.mxu0 0.0
        %404 = vmatpush1.msra.mxu0 0.0
        %405 = vmatprep.subr.mxu0 0.0
        %406 = vmatpush1.msra.mxu0 0.0
        %407 = vmatprep.subr.mxu0 0.0
        %408 = vmatpush1.msra.mxu0 0.0
        %409 = vmatprep.subr.mxu0 0.0
        %410 = vmatpush1.msra.mxu0 %v379
        %411 = vmatprep.subr.mxu0 0.0
        %412 = vmatpush1.msra.mxu0 %v361
        %413 = vmatprep.subr.mxu0 0.0
        %414 = vmatpush2.msra.mxu0 0.0
        %415 = vmatprep.subr.mxu0 0.0
        %416 = vmatpush2.msra.mxu0 0.0
        %417 = vmatprep.subr.mxu0 0.0
        %418 = vmatpush2.msra.mxu0 0.0
        %419 = vmatprep.subr.mxu0 0.0
        %420 = vmatpush2.msra.mxu0 0.0
        %421 = vmatprep.subr.mxu0 0.0
        %422 = vmatpush2.msra.mxu0 0.0
        %423 = vmatprep.subr.mxu0 0.0
        %424 = vmatpush2.msra.mxu0 0.0
        %425 = vmatprep.subr.mxu0 0.0
        %426 = vmatpush2.msra.mxu0 0.0
        %427 = vmatprep.subr.mxu0 0.0
        %428 = vmatpush2.msra.mxu0 0.0
        %429 = vmatprep.subr.mxu0 0.0
        %430 = vmatpush2.msra.mxu0 0.0
        %431 = vmatprep.subr.mxu0 0.0
        %432 = vmatpush2.msra.mxu0 0.0
        %433 = vmatprep.subr.mxu0 0.0
        %434 = vmatpush2.msra.mxu0 0.0
        %435 = vmatprep.subr.mxu0 0.0
        %436 = vmatpush2.msra.mxu0 0.0
        %437 = vmatprep.subr.mxu0 0.0
        %438 = vmatpush2.msra.mxu0 0.0
        %439 = vmatprep.subr.mxu0 0.0
        %440 = vmatpush2.msra.mxu0 0.0
        %441 = vmatprep.subr.mxu0 0.0
        %442 = vmatpush2.msra.mxu0 0.0
        %443 = vmatprep.subr.mxu0 0.0
        %444 = vmatpush2.msra.mxu0 0.0
        %445 = vmatprep.mubr.f32.mxu0 0.0
        %446 = vmatmul.mubr.f32.gmra.mxu0 %v372
        %v447 = vpop.f32.mrf.mxu0
        %v448 = vadd.f32 %v368, %v447
        %v449 = vpop.f32.mrf.mxu0
        %450 = vmatprep.mubr.f32.mxu0 0.0
        %451 = vmatmul.mubr.f32.gmra.mxu0 %v375
        %v452 = vpop.f32.mrf.mxu0
        %v453 = vadd.f32 %v368, %v452
        %v454 = vpop.f32.mrf.mxu0
        %455 = vdwg.mxu0
        %vm456 = vcmp.gt.f32.partialorder %v448, 0.0
        %vm457 = vcmp.gt.f32.partialorder %v453, 0.0
        %v458 = vmin.f32 %v448, 0.0
        %v459 = vmin.f32 %v453, 0.0
        %v460 = vmul.f32 %v458, 1.442695
        %v461 = vpow.pop %v460
        %v462 = vmul.f32 %v459, 1.442695
        %v463 = vpow.pop %v462
        %v464 = vsub.f32 %v461, 1.0
        %v465 = vsub.f32 %v463, 1.0
        %v466 = vmul.f32 %v464, 0.9
        %v467 = vmul.f32 %v465, 0.9
        %v468 = vsel %vm456, %v448, %v466
        %v469 = vsel %vm457, %v453, %v467
        %v470 = vld [vmem:[#allocation3] sm:$0x3]
        %vm471 = vcmask 130054
        %472 = vst.msk [vmem:[#allocation3 - $0x6] sm:$0xc0] %vm471, %v469
        %v475 = vrot.slane %v468, 6
        %v476 = vrot.slane %v469, 6
        %v477 = vsel %vm323, %v475, %v476
        %v480 = vsel %vm323, %v470, %v475
        %v482 = vrot.slane %v480, 1
        %v483 = vrot.slane %v477, 1
        %v484 = vsel %vm331, %v482, %v483
        %v485 = vrot.slane %v476, 1
        %v486 = vsel %vm331, %v483, %v485
        %487 = vrot.lane.b32.xlu0 %v484, 16
        %v488 = vpop.permute.xlu0 %487
        %489 = vrot.lane.b32.xlu0 %v486, 16
        %v490 = vpop.permute.xlu0 %489
        %v493 = vrot.slane %v480, 2
        %v494 = vrot.slane %v477, 2
        %v495 = vsel %vm343, %v493, %v494
        %v496 = vrot.slane %v476, 2
        %v497 = vsel %vm343, %v494, %v496
        %498 = vrot.lane.b32.xlu0 %v495, 32
        %v499 = vpop.permute.xlu0 %498
        %500 = vrot.lane.b32.xlu0 %v497, 32
        %v501 = vpop.permute.xlu0 %500
        %vm504 = vcmask 130048
        %v505 = vsel %vm504, %v480, %v488
        %v506 = vsel %vm504, %v477, %v490
        %vm507 = vcmask 261120
        %v508 = vsel %vm507, %v505, %v499
        %v509 = vsel %vm507, %v506, %v501
        %v510 = vld [vmem:[%s3] sm:$0xff]
        %v511 = vld [vmem:[%s3 + $0x8] sm:$0xff]
        %v512 = vld [vmem:[%s3 + $0x10] sm:$0xff]
        %v513 = vld [vmem:[%s3 + $0x18] sm:$0xff]
        %v514 = vld [vmem:[%s3 + $0x20] sm:$0xff]
        %v515 = vld [vmem:[%s3 + $0x28] sm:$0xff]
        %v516 = vld [vmem:[%s4] sm:$0x1]
        %v518 = vlaneseq
        %v519 = vshrl.u32 %v518, 7
        %v520 = vsub.s32 0, %v519
        %v521 = vrot.slane %v516, %v520
        %vm523 = vcmask 392192
        %v525 = vsel %vm523, %v508, 0
        %v528 = vsel %vm523, %v509, 0
        %530 = vmatprep.subr.mxu0 0.0
        %531 = vmatpush1.msra.mxu0 0.0
        %532 = vmatprep.subr.mxu0 0.0
        %533 = vmatpush1.msra.mxu0 0.0
        %534 = vmatprep.subr.mxu0 0.0
        %535 = vmatpush1.msra.mxu0 0.0
        %536 = vmatprep.subr.mxu0 0.0
        %537 = vmatpush1.msra.mxu0 0.0
        %538 = vmatprep.subr.mxu0 0.0
        %539 = vmatpush1.msra.mxu0 0.0
        %540 = vmatprep.subr.mxu0 0.0
        %541 = vmatpush1.msra.mxu0 0.0
        %542 = vmatprep.subr.mxu0 0.0
        %543 = vmatpush1.msra.mxu0 0.0
        %544 = vmatprep.subr.mxu0 0.0
        %545 = vmatpush1.msra.mxu0 0.0
        %546 = vmatprep.subr.mxu0 0.0
        %547 = vmatpush1.msra.mxu0 0.0
        %548 = vmatprep.subr.mxu0 0.0
        %549 = vmatpush1.msra.mxu0 0.0
        %550 = vmatprep.subr.mxu0 0.0
        %551 = vmatpush1.msra.mxu0 %v515
        %552 = vmatprep.subr.mxu0 0.0
        %553 = vmatpush1.msra.mxu0 %v514
        %554 = vmatprep.subr.mxu0 0.0
        %555 = vmatpush1.msra.mxu0 %v513
        %556 = vmatprep.subr.mxu0 0.0
        %557 = vmatpush1.msra.mxu0 %v512
        %558 = vmatprep.subr.mxu0 0.0
        %559 = vmatpush1.msra.mxu0 %v511
        %560 = vmatprep.subr.mxu0 0.0
        %561 = vmatpush1.msra.mxu0 %v510
        %562 = vmatprep.subr.mxu0 0.0
        %563 = vmatpush2.msra.mxu0 0.0
        %564 = vmatprep.subr.mxu0 0.0
        %565 = vmatpush2.msra.mxu0 0.0
        %566 = vmatprep.subr.mxu0 0.0
        %567 = vmatpush2.msra.mxu0 0.0
        %568 = vmatprep.subr.mxu0 0.0
        %569 = vmatpush2.msra.mxu0 0.0
        %570 = vmatprep.subr.mxu0 0.0
        %571 = vmatpush2.msra.mxu0 0.0
        %572 = vmatprep.subr.mxu0 0.0
        %573 = vmatpush2.msra.mxu0 0.0
        %574 = vmatprep.subr.mxu0 0.0
        %575 = vmatpush2.msra.mxu0 0.0
        %576 = vmatprep.subr.mxu0 0.0
        %577 = vmatpush2.msra.mxu0 0.0
        %578 = vmatprep.subr.mxu0 0.0
        %579 = vmatpush2.msra.mxu0 0.0
        %580 = vmatprep.subr.mxu0 0.0
        %581 = vmatpush2.msra.mxu0 0.0
        %582 = vmatprep.subr.mxu0 0.0
        %583 = vmatpush2.msra.mxu0 0.0
        %584 = vmatprep.subr.mxu0 0.0
        %585 = vmatpush2.msra.mxu0 0.0
        %586 = vmatprep.subr.mxu0 0.0
        %587 = vmatpush2.msra.mxu0 0.0
        %588 = vmatprep.subr.mxu0 0.0
        %589 = vmatpush2.msra.mxu0 0.0
        %590 = vmatprep.subr.mxu0 0.0
        %591 = vmatpush2.msra.mxu0 0.0
        %592 = vmatprep.subr.mxu0 0.0
        %593 = vmatpush2.msra.mxu0 0.0
        %594 = vmatprep.mubr.f32.mxu0 0.0
        %595 = vmatmul.mubr.f32.gmra.mxu0 %v525
        %v596 = vpop.f32.mrf.mxu0
        %v597 = vadd.f32 %v521, %v596
        %v598 = vpop.f32.mrf.mxu0
        %599 = vmatprep.mubr.f32.mxu0 0.0
        %600 = vmatmul.mubr.f32.gmra.mxu0 %v528
        %v601 = vpop.f32.mrf.mxu0
        %v602 = vadd.f32 %v521, %v601
        %v603 = vpop.f32.mrf.mxu0
        %604 = vdwg.mxu0
        %vm605 = vcmp.gt.f32.partialorder %v597, 0.0
        %vm606 = vcmp.gt.f32.partialorder %v602, 0.0
        %v607 = vmin.f32 %v597, 0.0
        %v608 = vmin.f32 %v602, 0.0
        %v609 = vmul.f32 %v607, 1.442695
        %v610 = vpow.pop %v609
        %v611 = vmul.f32 %v608, 1.442695
        %v612 = vpow.pop %v611
        %v613 = vsub.f32 %v610, 1.0
        %v614 = vsub.f32 %v612, 1.0
        %v615 = vmul.f32 %v613, 0.8
        %v616 = vmul.f32 %v614, 0.8
        %v617 = vsel %vm605, %v597, %v615
        %v618 = vsel %vm606, %v602, %v616
        %v619 = vld [vmem:[#allocation4] sm:$0x3]
        %vm620 = vcmask 261126
        %621 = vst.msk [vmem:[#allocation4 - $0x6] sm:$0xc0] %vm620, %v618
        %v624 = vrot.slane %v617, 6
        %v625 = vrot.slane %v618, 6
        %v626 = vsel %vm323, %v624, %v625
        %v629 = vsel %vm323, %v619, %v624
        %v631 = vrot.slane %v629, 1
        %v632 = vrot.slane %v626, 1
        %v633 = vsel %vm331, %v631, %v632
        %v634 = vrot.slane %v625, 1
        %v635 = vsel %vm331, %v632, %v634
        %636 = vrot.lane.b32.xlu0 %v633, 32
        %v637 = vpop.permute.xlu0 %636
        %638 = vrot.lane.b32.xlu0 %v635, 32
        %v639 = vpop.permute.xlu0 %638
        %v642 = vrot.slane %v629, 2
        %v643 = vrot.slane %v626, 2
        %v644 = vsel %vm343, %v642, %v643
        %v645 = vrot.slane %v625, 2
        %v646 = vsel %vm343, %v643, %v645
        %647 = vrot.lane.b32.xlu0 %v644, 64
        %v648 = vpop.permute.xlu0 %647
        %649 = vrot.lane.b32.xlu0 %v646, 64
        %v650 = vpop.permute.xlu0 %649
        %v653 = vsel %vm507, %v629, %v637
        %v654 = vsel %vm507, %v626, %v639
        %vm655 = vcmask 523264
        %v656 = vsel %vm655, %v653, %v648
        %v657 = vsel %vm655, %v654, %v650
        %v658 = vld [vmem:[%s5] sm:$0xff]
        %v659 = vld [vmem:[%s5 + $0x8] sm:$0xff]
        %v660 = vld [vmem:[%s5 + $0x10] sm:$0xff]
        %v661 = vld [vmem:[%s5 + $0x18] sm:$0xff]
        %v662 = vld [vmem:[%s5 + $0x20] sm:$0xff]
        %v663 = vld [vmem:[%s5 + $0x28] sm:$0xff]
        %v664 = vld [vmem:[%s5 + $0x30] sm:$0xff]
        %v665 = vld [vmem:[%s5 + $0x38] sm:$0xff]
        %v666 = vld [vmem:[%s5 + $0x40] sm:$0xff]
        %v667 = vld [vmem:[%s5 + $0x48] sm:$0xff]
        %v668 = vld [vmem:[%s5 + $0x50] sm:$0xff]
        %v669 = vld [vmem:[%s5 + $0x58] sm:$0xff]
        %v670 = vld [vmem:[%s6] sm:$0x1]
        %v672 = vlaneseq
        %v673 = vshrl.u32 %v672, 7
        %v674 = vsub.s32 0, %v673
        %v675 = vrot.slane %v670, %v674
        %vm677 = vcmask 785408
        %v679 = vsel %vm677, %v656, 0
        %v682 = vsel %vm677, %v657, 0
        %684 = vmatprep.subr.mxu0 0.0
        %685 = vmatpush1.msra.mxu0 0.0
        %686 = vmatprep.subr.mxu0 0.0
        %687 = vmatpush1.msra.mxu0 0.0
        %688 = vmatprep.subr.mxu0 0.0
        %689 = vmatpush1.msra.mxu0 0.0
        %690 = vmatprep.subr.mxu0 0.0
        %691 = vmatpush1.msra.mxu0 0.0
        %692 = vmatprep.subr.mxu0 0.0
        %693 = vmatpush1.msra.mxu0 %v669
        %694 = vmatprep.subr.mxu0 0.0
        %695 = vmatpush1.msra.mxu0 %v668
        %696 = vmatprep.subr.mxu0 0.0
        %697 = vmatpush1.msra.mxu0 %v667
        %698 = vmatprep.subr.mxu0 0.0
        %699 = vmatpush1.msra.mxu0 %v666
        %700 = vmatprep.subr.mxu0 0.0
        %701 = vmatpush1.msra.mxu0 %v665
        %702 = vmatprep.subr.mxu0 0.0
        %703 = vmatpush1.msra.mxu0 %v664
        %704 = vmatprep.subr.mxu0 0.0
        %705 = vmatpush1.msra.mxu0 %v663
        %706 = vmatprep.subr.mxu0 0.0
        %707 = vmatpush1.msra.mxu0 %v662
        %708 = vmatprep.subr.mxu0 0.0
        %709 = vmatpush1.msra.mxu0 %v661
        %710 = vmatprep.subr.mxu0 0.0
        %711 = vmatpush1.msra.mxu0 %v660
        %712 = vmatprep.subr.mxu0 0.0
        %713 = vmatpush1.msra.mxu0 %v659
        %714 = vmatprep.subr.mxu0 0.0
        %715 = vmatpush1.msra.mxu0 %v658
        %716 = vmatprep.subr.mxu0 0.0
        %717 = vmatpush2.msra.mxu0 0.0
        %718 = vmatprep.subr.mxu0 0.0
        %719 = vmatpush2.msra.mxu0 0.0
        %720 = vmatprep.subr.mxu0 0.0
        %721 = vmatpush2.msra.mxu0 0.0
        %722 = vmatprep.subr.mxu0 0.0
        %723 = vmatpush2.msra.mxu0 0.0
        %724 = vmatprep.subr.mxu0 0.0
        %725 = vmatpush2.msra.mxu0 0.0
        %726 = vmatprep.subr.mxu0 0.0
        %727 = vmatpush2.msra.mxu0 0.0
        %728 = vmatprep.subr.mxu0 0.0
        %729 = vmatpush2.msra.mxu0 0.0
        %730 = vmatprep.subr.mxu0 0.0
        %731 = vmatpush2.msra.mxu0 0.0
        %732 = vmatprep.subr.mxu0 0.0
        %733 = vmatpush2.msra.mxu0 0.0
        %734 = vmatprep.subr.mxu0 0.0
        %735 = vmatpush2.msra.mxu0 0.0
        %736 = vmatprep.subr.mxu0 0.0
        %737 = vmatpush2.msra.mxu0 0.0
        %738 = vmatprep.subr.mxu0 0.0
        %739 = vmatpush2.msra.mxu0 0.0
        %740 = vmatprep.subr.mxu0 0.0
        %741 = vmatpush2.msra.mxu0 0.0
        %742 = vmatprep.subr.mxu0 0.0
        %743 = vmatpush2.msra.mxu0 0.0
        %744 = vmatprep.subr.mxu0 0.0
        %745 = vmatpush2.msra.mxu0 0.0
        %746 = vmatprep.subr.mxu0 0.0
        %747 = vmatpush2.msra.mxu0 0.0
        %748 = vmatprep.mubr.f32.mxu0 0.0
        %749 = vmatmul.mubr.f32.gmra.mxu0 %v679
        %v750 = vpop.f32.mrf.mxu0
        %v751 = vadd.f32 %v675, %v750
        %v752 = vpop.f32.mrf.mxu0
        %753 = vmatprep.mubr.f32.mxu0 0.0
        %754 = vmatmul.mubr.f32.gmra.mxu0 %v682
        %v755 = vpop.f32.mrf.mxu0
        %v756 = vadd.f32 %v675, %v755
        %v757 = vpop.f32.mrf.mxu0
        %758 = vdwg.mxu0
        %vm759 = vcmp.gt.f32.partialorder %v751, 0.0
        %vm760 = vcmp.gt.f32.partialorder %v756, 0.0
        %v761 = vmin.f32 %v751, 0.0
        %v762 = vmin.f32 %v756, 0.0
        %v763 = vmul.f32 %v761, 1.442695
        %v764 = vpow.pop %v763
        %v765 = vmul.f32 %v762, 1.442695
        %v766 = vpow.pop %v765
        %v767 = vsub.f32 %v764, 1.0
        %v768 = vsub.f32 %v766, 1.0
        %v769 = vmul.f32 %v767, 0.7
        %v770 = vmul.f32 %v768, 0.7
        %v771 = vsel %vm759, %v751, %v769
        %v772 = vsel %vm760, %v756, %v770
        %v773 = vld [vmem:[%s293] sm:$0x1]
        %vm774 = vcmask 39936
        %v775 = vsel %vm774, %v771, 0.0
        %v776 = vsel %vm774, %v772, 0.0
        %v777 = vadd.f32 %v775, %v776
        %v778 = vrot.slane %v777, 4
        %v779 = vadd.f32 %v777, %v778
        %v780 = vrot.slane %v779, 2
        %v781 = vadd.f32 %v779, %v780
        %v782 = vrot.slane %v781, 1
        %v783 = vadd.f32 %v781, %v782
        %v784 = vadd.f32 %v773, %v783
        %vm785 = vcmask 32768
        %786 = vst.msk [vmem:[%s293] sm:$0x1] %vm785, %v784
        // Predicated region
        $region53: #{tpu_custom_call.1} parent=47 // pred_check
          %p787 = pneg %p304
        $region54: #{tpu_custom_call.1} parent=47 // pred_check_branch
          %789 = sbr.rel (%p787) target = $region56
        $region55: #{tpu_custom_call.1} parent=47 // pred_region
          %v790 = vld [vmem:[%s293] sm:$0x1]
          %v791 = vmul.f32 %v790, 0.0625
          %792 = vst.msk [vmem:[%s293] sm:$0x1] %vm785, %v791
        $region56: #{tpu_custom_call.1} parent=47 // pred_fallthru
          _
        %s793 = sand.u32 %s195, 1
        %s794 = scalar_lea.sflag [#allocation6], %s793
        %s795 = sand.u32 %s195, 1
        %s796 = scalar_lea.vmem [#allocation5], %s795
        // Predicated region
        $region57: #{tpu_custom_call.1} parent=47 // pred_check
          %p797 = pneg %p205
        $region58: #{tpu_custom_call.1} parent=47 // pred_check_branch
          %799 = sbr.rel (%p797) target = $region60
        $region59: #{tpu_custom_call.1} parent=47 // pred_region
          %s801 = ssub.s32 16, 16
          %802 = vsyncadd %s794, %s801
          %s803 = smul.addr %s25, 16
          %s804 = scalar_lea.hbm %s7, %s803
          %s806 = sshll.u32 %s796, 4
          %s807 = int_to_ptr.vmem [resolvable:$true] %s806
          %809 = dma.vmem_to_hbm [thread:$0]  %s807, 16, %s804, %s794
        $region60: #{tpu_custom_call.1} parent=47 // pred_fallthru
          _
      $region48: #{tpu_custom_call.1} parent=5 // pred_fallthru
        _
      %p810 = scmp.le.s32.totalorder 2, %s16
      // Predicated region
      $region61: #{tpu_custom_call.1} parent=5 // pred_check
        %p811 = pneg %p810
      $region62: #{tpu_custom_call.1} parent=5 // pred_check_branch
        %813 = sbr.rel (%p811) target = $region64
      $region63: #{tpu_custom_call.1} parent=5 // pred_region
        %s814 = ssub.s32 %s16, 2
        // Predicated region
        $region65: #{tpu_custom_call.1} parent=63 // pred_check
          %p815 = pneg %p211
        $region66: #{tpu_custom_call.1} parent=63 // pred_check_branch
          %817 = sbr.rel (%p815) target = $region68
        $region67: #{tpu_custom_call.1} parent=63 // pred_region
          %s818 = sand.u32 %s196, 1
          %s819 = scalar_lea.sflag [#allocation6], %s818
          %s820 = sand.u32 %s196, 1
          %s821 = scalar_lea.vmem [#allocation5], %s820
          %822 = dma.done %s819, 16
        $region68: #{tpu_custom_call.1} parent=63 // pred_fallthru
          _
      $region64: #{tpu_custom_call.1} parent=5 // pred_fallthru
        _
    $region6: #{tpu_custom_call.1} parent=1 // loop_footer
      %s20 = sadd.s32 1, %s16
    $region7: #{tpu_custom_call.1} parent=1 // loop_footer_branch
      %15 = sbr.rel target = $region3
    $region8: #{tpu_custom_call.1} parent=1 // loop_exit
      _
    %823 = vsyncpa [#allocation6], 1
    %s824 = scalar_lea.sflag [#allocation6], 1
    %825 = vsyncpa %s824, 1

</llo_original>
